<compile_context>
chip_gen: v6e
topology: v6e:2x2x1
jax: 0.10.0
libtpu: 0.0.40
codegen_flags: <defaults>
</compile_context>

<pallas_src>
import jax
import jax.numpy as jnp
from jax.experimental import pallas as pl
from jax.experimental.pallas import tpu as pltpu

PACK = 32  # logical rows packed per lane-dense row (output -> 32*4 = 128 lanes)


def actor_kernel(x_ref, w_ref, b_ref, mu_ref):
    # Fused head on packed layout: (tb, PACK*in) @ (PACK*in, PACK*act) + bias
    mu_ref[...] = (jnp.dot(x_ref[...], w_ref[...],
                           preferred_element_type=jnp.float32)
                   + b_ref[...]).astype(mu_ref.dtype)


def _fuse_params(w_fc, b_fc, w_mu, b_mu):
    """Exact algebraic fusion of the two affine layers (weights stored (in, out))."""
    w_c = w_fc @ w_mu                                  # (in_f, n_act)
    b_c = (b_fc @ w_mu + b_mu).reshape(1, -1)          # (1,   n_act)
    return w_c, b_c


def _block_diag_params(w_c, b_c):
    """32-way block-diagonal weight / tiled bias for the lane-dense packed GEMM."""
    in_f, n_act = w_c.shape
    eye = jnp.eye(PACK, dtype=w_c.dtype)
    # w_bd[in_f*p + k, n_act*q + o] = w_c[k, o] * (p == q)
    w_bd = jnp.einsum('pq,ko->pkqo', eye, w_c).reshape(PACK * in_f, PACK * n_act)
    b_bd = jnp.tile(b_c, (1, PACK))                    # (1, PACK*n_act)
    return w_bd, b_bd


def _round_up(a, m):
    return ((a + m - 1) // m) * m


def actor_forward(x, w_fc, b_fc, w_mu, b_mu, log_std, *,
                  block_rows=2048, min_pallas_batch=4096):
    """x: (B, input_size) f32. Returns (mu: (B, n_actions), std: (1,))."""
    B, in_f = x.shape
    n_act = w_mu.shape[1]

    w_c, b_c = _fuse_params(w_fc, b_fc, w_mu, b_mu)
    std = jnp.exp(log_std)  # single scalar transcendental: plain JAX

    # Small-batch fallback: kernel launch cost dwarfs a tiny GEMM.
    if B < min_pallas_batch:
        return x @ w_c + b_c, std

    # ---- lane-dense packed main body -----------------------------------
    b_main = (B // PACK) * PACK
    r = b_main // PACK                                  # packed rows
    x_packed = x[:b_main].reshape(r, PACK * in_f)       # free row-major reshape
    w_bd, b_bd = _block_diag_params(w_c, b_c)

    # Tile rows: multiple of 8 (sublane); split into >= 2 blocks when possible
    # so v7x's 2 TensorCores both get work; cap at block_rows for VMEM budget.
    if r <= block_rows:
        tb = _round_up(pl.cdiv(r, 2), 8) if r >= 16 else r
    else:
        tb = block_rows
    tb = min(tb, r)
    n_blocks = pl.cdiv(r, tb)                           # last block may be partial

    flops = 2 * r * (PACK * in_f) * (PACK * n_act)
    bytes_accessed = 4 * (r * PACK * in_f               # x (packed)
                          + (PACK * in_f) * (PACK * n_act)   # block-diag weight
                          + PACK * n_act                 # bias
                          + r * PACK * n_act)            # mu (packed)

    mu_packed = pl.pallas_call(
        actor_kernel,
        out_shape=jax.ShapeDtypeStruct((r, PACK * n_act), jnp.float32),
        grid=(n_blocks,),
        in_specs=[
            pl.BlockSpec((tb, PACK * in_f), lambda i: (i, 0)),           # x tile
            pl.BlockSpec((PACK * in_f, PACK * n_act), lambda i: (0, 0)),  # weight
            pl.BlockSpec((1, PACK * n_act), lambda i: (0, 0)),            # bias
        ],
        out_specs=pl.BlockSpec((tb, PACK * n_act), lambda i: (i, 0)),
        compiler_params=pltpu.CompilerParams(
            dimension_semantics=("parallel",)),
        cost_estimate=pl.CostEstimate(
            flops=flops, transcendentals=0, bytes_accessed=bytes_accessed),
    )(x_packed, w_bd, b_bd)

    mu = mu_packed.reshape(b_main, n_act)               # free row-major reshape

    if b_main != B:
        # < PACK leftover rows: tiny plain-JAX affine (avoids padding x in HBM).
        mu_tail = x[b_main:] @ w_c + b_c
        mu = jnp.concatenate([mu, mu_tail], axis=0)

    return mu, std


def init_params(key, input_size=8, hidden=16, n_actions=4):
    """Deterministic init mirroring nn.Linear default U(-1/sqrt(fan_in), +...).
    Weights stored transposed as (in, out)."""
    k1, k2, k3, k4 = jax.random.split(key, 4)
    bound1 = 1.0 / jnp.sqrt(input_size)
    bound2 = 1.0 / jnp.sqrt(hidden)
    w_fc = jax.random.uniform(k1, (input_size, hidden), jnp.float32, -bound1, bound1)
    b_fc = jax.random.uniform(k2, (hidden,), jnp.float32, -bound1, bound1)
    w_mu = jax.random.uniform(k3, (hidden, n_actions), jnp.float32, -bound2, bound2)
    b_mu = jax.random.uniform(k4, (n_actions,), jnp.float32, -bound2, bound2)
    log_std = jnp.zeros((1,), jnp.float32)   # nn.Parameter(torch.zeros(1))
    return w_fc, b_fc, w_mu, b_mu, log_std


if __name__ == "__main__":
    key = jax.random.PRNGKey(0)
    kx, kp, kx2 = jax.random.split(key, 3)

    input_size, hidden, n_actions = 8, 16, 4
    w_fc, b_fc, w_mu, b_mu, log_std = init_params(
        kp, input_size=input_size, hidden=hidden, n_actions=n_actions)

    def ref_mu(x):   # unfused two-step math, as in the PyTorch module
        return (x @ w_fc + b_fc) @ w_mu + b_mu

    # 1) Spec-sized example (batch=2, like `torch.rand(1, 8)`): small-batch path.
    x_small = jax.random.uniform(kx, (2, input_size), jnp.float32)
    mu_s, std_s = actor_forward(x_small, w_fc, b_fc, w_mu, b_mu, log_std)
    jax.block_until_ready((mu_s, std_s))
    assert mu_s.shape == (2, n_actions) and std_s.shape == (1,)
    assert jnp.allclose(mu_s, ref_mu(x_small), atol=1e-5)
    assert jnp.allclose(std_s, jnp.exp(log_std), atol=1e-6)

    # 2) Larger batch that exercises the lane-dense Pallas kernel, including a
    #    partial last grid block and the <32-row plain-JAX tail.
    B = 6403
    x_big = jax.random.uniform(kx2, (B, input_size), jnp.float32)
    mu_b, std_b = actor_forward(x_big, w_fc, b_fc, w_mu, b_mu, log_std)
    jax.block_until_ready((mu_b, std_b))
    assert mu_b.shape == (B, n_actions) and std_b.shape == (1,)
    assert jnp.allclose(mu_b, ref_mu(x_big), atol=1e-5)
    assert jnp.allclose(std_b, jnp.exp(log_std), atol=1e-6)

    print("KERNEL_OK")
</pallas_src>

<mosaic_0001>
module attributes {stable_mosaic.version = 11 : i64} {
  func.func @actor_kernel(%arg0: i32, %arg1: memref<104x256xf32, #tpu.memory_space<vmem>>, %arg2: memref<256x128xf32, #tpu.memory_space<vmem>>, %arg3: memref<1x128xf32, #tpu.memory_space<vmem>>, %arg4: memref<104x128xf32, #tpu.memory_space<vmem>>) attributes {dimension_semantics = [#tpu.dimension_semantics<parallel>], iteration_bounds = array<i64: 2>, scalar_prefetch = 0 : i64, scratch_operands = 0 : i64, tpu.core_type = #tpu.core_type<tc>, window_params = [{transform_indices = @transform_0, window_bounds = array<i64: 104, 256>}, {pipeline_mode = #tpu.pipeline_mode<synchronous>, transform_indices = @transform_1, window_bounds = array<i64: 256, 128>}, {pipeline_mode = #tpu.pipeline_mode<synchronous>, transform_indices = @transform_2, window_bounds = array<i64: 1, 128>}, {transform_indices = @transform_3, window_bounds = array<i64: 104, 128>}]} {
    %c0 = arith.constant 0 : index
    %c0_0 = arith.constant 0 : index
    %0 = vector.load %arg1[%c0, %c0_0] : memref<104x256xf32, #tpu.memory_space<vmem>>, vector<104x256xf32>
    %c0_1 = arith.constant 0 : index
    %c0_2 = arith.constant 0 : index
    %1 = vector.load %arg2[%c0_1, %c0_2] : memref<256x128xf32, #tpu.memory_space<vmem>>, vector<256x128xf32>
    %cst = arith.constant dense<0.000000e+00> : vector<104x128xf32>
    %2 = tpu.matmul %0, %1, %cst {dimension_numbers = #tpu.dot_dimension_numbers<[1], [0], [0], [1], [0, 0, 1, 1], [], []>} : vector<104x256xf32>, vector<256x128xf32>, vector<104x128xf32> -> vector<104x128xf32>
    %c0_3 = arith.constant 0 : index
    %c0_4 = arith.constant 0 : index
    %3 = vector.load %arg3[%c0_3, %c0_4] : memref<1x128xf32, #tpu.memory_space<vmem>>, vector<1x128xf32>
    %4 = vector.broadcast %3 : vector<1x128xf32> to vector<104x128xf32>
    %5 = arith.addf %2, %4 : vector<104x128xf32>
    %c0_5 = arith.constant 0 : index
    %c0_6 = arith.constant 0 : index
    %6 = vector.load %arg4[%c0_5, %c0_6] : memref<104x128xf32, #tpu.memory_space<vmem>>, vector<104x128xf32>
    tpu.vector_store %arg4[%c0_5, %c0_6], %5 {strides = array<i32>} : memref<104x128xf32, #tpu.memory_space<vmem>>, vector<104x128xf32>,
    return
  }
  func.func @transform_0(%arg0: i32) -> (i32, i32) {
    %c0_i32 = arith.constant 0 : i32
    %c0_i32_0 = arith.constant 0 : i32
    return %arg0, %c0_i32 : i32, i32
  }
  func.func @transform_1(%arg0: i32) -> (i32, i32) {
    %c0_i32 = arith.constant 0 : i32
    %c0_i32_0 = arith.constant 0 : i32
    %c0_i32_1 = arith.constant 0 : i32
    return %c0_i32, %c0_i32_0 : i32, i32
  }
  func.func @transform_2(%arg0: i32) -> (i32, i32) {
    %c0_i32 = arith.constant 0 : i32
    %c0_i32_0 = arith.constant 0 : i32
    %c0_i32_1 = arith.constant 0 : i32
    return %c0_i32, %c0_i32_0 : i32, i32
  }
  func.func @transform_3(%arg0: i32) -> (i32, i32) {
    %c0_i32 = arith.constant 0 : i32
    %c0_i32_0 = arith.constant 0 : i32
    return %arg0, %c0_i32 : i32, i32
  }
}

</mosaic_0001>

<llo_original>
// kernel: tpu_custom_call.1
$region0: #{tpu_custom_call.1}
  #allocation0 [shape = 'u32[]', space=smem, size = 0x4, offset = 0x4, fixed_abs, tag = 'smem constant byte address 0x4 - core index']
  #allocation1 [shape = 'u32[144,128]{1,0:T(1,128)}', space=vmem, size = 0x12000, scoped, tag = 'internal scratch']
  %s0 = inlined_call_operand.hbm [shape: f32[200,256], index: 0, kind: input, shape index: {}]
  %s1 = inlined_call_operand.hbm [shape: f32[256,128], index: 1, kind: input, shape index: {}]
  %s2 = inlined_call_operand.vmem [shape: f32[1,128], index: 2, kind: input, shape index: {}]
  %s3 = inlined_call_operand.hbm [shape: f32[200,128], index: 3, kind: output, shape index: {}]
  %s4 = sld [smem:[#allocation0]]
  $region53: #{tpu_custom_call.1} parent=0
    _
  %s6 = ssub.s32 1, %s4
  %s7 = scalar_select 0, %s6, %s4
  $region1: #{tpu_custom_call.1} parent=0
    #allocation2 [shape = 'u8[212992]{0}', space=vmem, size = 0x34000, scoped, tag = 'input window, operand 0']
    #allocation3 [shape = 's32[2]{0}', space=sflag, size = 0x8, scoped, tag = 'scoped memory for tpu_custom_call.1']
    #allocation4 [shape = 's32[2]{0}', space=sflag, size = 0x8, scoped, tag = 'scoped memory for tpu_custom_call.1']
    #allocation5 [shape = 'u8[131072]{0}', space=vmem, size = 0x20000, scoped, tag = 'input window, operand 1, single buffered']
    #allocation6 [shape = 's32[1]{0}', space=sflag, size = 0x4, scoped, tag = 'scoped memory for tpu_custom_call.1']
    #allocation7 [shape = 'u8[106496]{0}', space=vmem, size = 0x1a000, scoped, tag = 'output window, operand 0']
    %8 = vsyncpa [#allocation3], 0
    %s9 = scalar_lea.sflag [#allocation3], 1
    %10 = vsyncpa %s9, 0
    %11 = vsyncpa [#allocation6], 0
    %12 = vsyncpa [#allocation4], 0
    %s13 = scalar_lea.sflag [#allocation4], 1
    %14 = vsyncpa %s13, 0
    loop: start=0, step=1, limit=4
    $region2: #{tpu_custom_call.1} parent=1 // loop_pre_header
      _
    $region3: #{tpu_custom_call.1} parent=1 // loop_header
      %s16 = sphi 0, %s20
      %p17 = scmp.ge.s32.totalorder %s16, 4
      %s26 = sphi 0, %s28
      %s29 = sphi 0, %s26
      %s30 = sphi 0, %s29
      %s46 = sphi 0, %s30
      %s50 = sphi 0, %s50
      %s52 = sphi 0, %s50
      %s53 = sphi 0, %s52
      %s67 = sphi 0, %s53
      %s71 = sphi 0, %s71
      %s73 = sphi 0, %s71
      %s74 = sphi 0, %s73
      %s88 = sphi 0, %s74
      %s94 = sphi 0, %s96
      %s97 = sphi 0, %s94
      %s98 = sphi 0, %s97
      %s114 = sphi 0, %s98
    $region4: #{tpu_custom_call.1} parent=1 // loop_header_branch
      %19 = sbr.rel (%p17) target = $region8
    $region5: #{tpu_custom_call.1} parent=1 // loop_body
      %s21 = ssub.s32 %s16, 1
      %s22 = ssub.s32 %s16, 2
      %s23 = sadd.s32 %s16, 1
      %s24 = ssub.s32 %s16, %s23
      %p25 = scmp.eq.s32.totalorder %s24, 0
      %s27 = sadd.s32 %s26, 1
      %s28 = scalar_select %p25, %s26, %s27
      %p31 = pneg %p25
      %p32 = scmp.eq.s32.totalorder %s16, 1
      %p33 = por %p31, %p32
      %p34 = scmp.ne.s32.totalorder %s26, %s29
      %p35 = scmp.eq.s32.totalorder %s16, 0
      %p36 = por %p34, %p35
      %p37 = scmp.ne.s32.totalorder %s26, %s29
      %p38 = scmp.eq.s32.totalorder %s21, 1
      %p39 = por %p37, %p38
      %p40 = scmp.ne.s32.totalorder %s29, %s30
      %p41 = scmp.eq.s32.totalorder %s21, 0
      %p42 = por %p40, %p41
      %p43 = scmp.ne.s32.totalorder %s29, %s30
      %p44 = scmp.eq.s32.totalorder %s22, 1
      %p45 = por %p43, %p44
      %p47 = scmp.ne.s32.totalorder %s30, %s46
      %p48 = scmp.eq.s32.totalorder %s22, 0
      %p49 = por %p47, %p48
      %s51 = sadd.s32 %s50, 1
      %p54 = scmp.eq.s32.totalorder %s16, 1
      %p55 = scmp.ne.s32.totalorder %s50, %s52
      %p56 = scmp.eq.s32.totalorder %s16, 0
      %p57 = por %p55, %p56
      %p58 = scmp.ne.s32.totalorder %s50, %s52
      %p59 = scmp.eq.s32.totalorder %s21, 1
      %p60 = por %p58, %p59
      %p61 = scmp.ne.s32.totalorder %s52, %s53
      %p62 = scmp.eq.s32.totalorder %s21, 0
      %p63 = por %p61, %p62
      %p64 = scmp.ne.s32.totalorder %s52, %s53
      %p65 = scmp.eq.s32.totalorder %s22, 1
      %p66 = por %p64, %p65
      %p68 = scmp.ne.s32.totalorder %s53, %s67
      %p69 = scmp.eq.s32.totalorder %s22, 0
      %p70 = por %p68, %p69
      %s72 = sadd.s32 %s71, 1
      %p75 = scmp.eq.s32.totalorder %s16, 1
      %p76 = scmp.ne.s32.totalorder %s71, %s73
      %p77 = scmp.eq.s32.totalorder %s16, 0
      %p78 = por %p76, %p77
      %p79 = scmp.ne.s32.totalorder %s71, %s73
      %p80 = scmp.eq.s32.totalorder %s21, 1
      %p81 = por %p79, %p80
      %p82 = scmp.ne.s32.totalorder %s73, %s74
      %p83 = scmp.eq.s32.totalorder %s21, 0
      %p84 = por %p82, %p83
      %p85 = scmp.ne.s32.totalorder %s73, %s74
      %p86 = scmp.eq.s32.totalorder %s22, 1
      %p87 = por %p85, %p86
      %p89 = scmp.ne.s32.totalorder %s74, %s88
      %p90 = scmp.eq.s32.totalorder %s22, 0
      %p91 = por %p89, %p90
      %s92 = ssub.s32 %s16, %s23
      %p93 = scmp.eq.s32.totalorder %s92, 0
      %s95 = sadd.s32 %s94, 1
      %s96 = scalar_select %p93, %s94, %s95
      %p99 = pneg %p93
      %p100 = scmp.eq.s32.totalorder %s16, 1
      %p101 = por %p99, %p100
      %p102 = scmp.ne.s32.totalorder %s94, %s97
      %p103 = scmp.eq.s32.totalorder %s16, 0
      %p104 = por %p102, %p103
      %p105 = scmp.ne.s32.totalorder %s94, %s97
      %p106 = scmp.eq.s32.totalorder %s21, 1
      %p107 = por %p105, %p106
      %p108 = scmp.ne.s32.totalorder %s97, %s98
      %p109 = scmp.eq.s32.totalorder %s21, 0
      %p110 = por %p108, %p109
      %p111 = scmp.ne.s32.totalorder %s97, %s98
      %p112 = scmp.eq.s32.totalorder %s22, 1
      %p113 = por %p111, %p112
      %p115 = scmp.ne.s32.totalorder %s98, %s114
      %p116 = scmp.eq.s32.totalorder %s22, 0
      %p117 = por %p115, %p116
      %p118 = scmp.le.s32.totalorder 1, %s16
      %p119 = scmp.lt.s32.totalorder %s16, 3
      %p120 = pnand %p118, %p119
      %p121 = pneg %p120
      // Predicated region
      $region9: #{tpu_custom_call.1} parent=5 // pred_check
        _
      $region10: #{tpu_custom_call.1} parent=5 // pred_check_branch
        %123 = sbr.rel (%p120) target = $region12
      $region11: #{tpu_custom_call.1} parent=5 // pred_region
        %s124 = ssub.s32 %s16, 1
        // Predicated region
        $region13: #{tpu_custom_call.1} parent=11 // pred_check
          %p125 = pneg %p63
        $region14: #{tpu_custom_call.1} parent=11 // pred_check_branch
          %127 = sbr.rel (%p125) target = $region16
        $region15: #{tpu_custom_call.1} parent=11 // pred_region
          %s129 = ssub.s32 4096, 4096
          %130 = vsyncadd [#allocation6], %s129
          %s131 = sshll.u32 [#allocation5], 4
          %s132 = int_to_ptr.vmem [resolvable:$true] %s131
          %137 = dma.hbm_to_vmem [thread:$0]  %s1, 4096, %s132, [#allocation6], 128, 128, 8
        $region16: #{tpu_custom_call.1} parent=11 // pred_fallthru
          _
        // Predicated region
        $region17: #{tpu_custom_call.1} parent=11 // pred_check
          %p138 = pneg %p84
        $region18: #{tpu_custom_call.1} parent=11 // pred_check_branch
          %140 = sbr.rel (%p138) target = $region20
        $region19: #{tpu_custom_call.1} parent=11 // pred_region
          _
        $region20: #{tpu_custom_call.1} parent=11 // pred_fallthru
          _
      $region12: #{tpu_custom_call.1} parent=5 // pred_fallthru
        _
      %p141 = scmp.lt.s32.totalorder %s16, 2
      // Predicated region
      $region21: #{tpu_custom_call.1} parent=5 // pred_check
        %p142 = pneg %p141
      $region22: #{tpu_custom_call.1} parent=5 // pred_check_branch
        %144 = sbr.rel (%p142) target = $region24
      $region23: #{tpu_custom_call.1} parent=5 // pred_region
        // Predicated region
        $region25: #{tpu_custom_call.1} parent=23 // pred_check
          %p145 = pneg %p36
        $region26: #{tpu_custom_call.1} parent=23 // pred_check_branch
          %147 = sbr.rel (%p145) target = $region28
        $region27: #{tpu_custom_call.1} parent=23 // pred_region
          %s148 = sand.u32 %s26, 1
          %s149 = scalar_lea.sflag [#allocation3], %s148
          %s150 = sand.u32 %s26, 1
          %s151 = smul.addr %s150, 208
          %s152 = scalar_lea.vmem [#allocation2], %s151
          %s153 = smul.u32 13, %s16
          %s154 = ssub.s32 25, %s153
          %p155 = scmp.lt.s32.totalorder %s154, 13
          %s156 = scalar_select %p155, %s154, 13
          %s157 = smul.u32 128, %s156
          %s158 = smul.u32 %s157, 2
          %s160 = ssub.s32 3328, %s158
          %161 = vsyncadd %s149, %s160
          %p162 = scmp.ne.s32.totalorder 0, %s158
          %s163 = smul.addr %s153, 2
          %s164 = smul.addr %s163, 128
          %s165 = scalar_lea.hbm %s0, %s164
          %s166 = smul.u32 16, %s156
          %s167 = sshll.u32 %s152, 4
          %s168 = int_to_ptr.vmem [resolvable:$true] %s167
          %s169 = sshll.u32 %s166, 4
          %173 = dma.hbm_to_vmem [thread:$0]  (%p162), %s165, %s169, %s168, %s149, 256, 256, 16
        $region28: #{tpu_custom_call.1} parent=23 // pred_fallthru
          _
      $region24: #{tpu_custom_call.1} parent=5 // pred_fallthru
        _
      %p174 = scmp.le.s32.totalorder 1, %s16
      %p175 = scmp.lt.s32.totalorder %s16, 3
      %p176 = pnand %p174, %p175
      %p177 = pneg %p176
      // Predicated region
      $region29: #{tpu_custom_call.1} parent=5 // pred_check
        _
      $region30: #{tpu_custom_call.1} parent=5 // pred_check_branch
        %179 = sbr.rel (%p176) target = $region32
      $region31: #{tpu_custom_call.1} parent=5 // pred_region
        %s180 = ssub.s32 %s16, 1
        %s181 = sand.u32 %s29, 1
        %s182 = scalar_lea.sflag [#allocation3], %s181
        %s183 = sand.u32 %s29, 1
        %s184 = smul.addr %s183, 208
        %s185 = scalar_lea.vmem [#allocation2], %s184
        // Predicated region
        $region33: #{tpu_custom_call.1} parent=31 // pred_check
          %p186 = pneg %p42
        $region34: #{tpu_custom_call.1} parent=31 // pred_check_branch
          %188 = sbr.rel (%p186) target = $region36
        $region35: #{tpu_custom_call.1} parent=31 // pred_region
          %189 = dma.done %s182, 3328
        $region36: #{tpu_custom_call.1} parent=31 // pred_fallthru
          _
        // Predicated region
        $region37: #{tpu_custom_call.1} parent=31 // pred_check
          %p190 = pneg %p63
        $region38: #{tpu_custom_call.1} parent=31 // pred_check_branch
          %192 = sbr.rel (%p190) target = $region40
        $region39: #{tpu_custom_call.1} parent=31 // pred_region
          %193 = dma.done [#allocation6], 4096
        $region40: #{tpu_custom_call.1} parent=31 // pred_fallthru
          _
        %s194 = sand.u32 %s29, 1
        %s195 = scalar_lea.sflag [#allocation3], %s194
        %s196 = sand.u32 %s29, 1
        %s197 = smul.addr %s196, 208
        %s198 = scalar_lea.vmem [#allocation2], %s197
        %p199 = pneg %p42
        %p200 = pneg %p39
        %p201 = pneg %p63
        %p202 = pneg %p60
        %p203 = pneg %p84
        %p204 = pneg %p81
        %p205 = pneg %p110
        %p206 = pneg %p107
        %s207 = sand.u32 %s97, 1
        %s208 = scalar_lea.sflag [#allocation4], %s207
        %s209 = sand.u32 %s97, 1
        %s210 = smul.addr %s209, 104
        %s211 = scalar_lea.vmem [#allocation7], %s210
        %s212 = smul.u32 13, %s21
        %s213 = ssub.s32 25, %s212
        %p214 = scmp.lt.s32.totalorder %s213, 13
        %s215 = scalar_select %p214, %s213, 13
        %s216 = smul.u32 128, %s215
        %s217 = smul.u32 %s216, 2
        %s218 = smul.u32 13, %s21
        %s219 = ssub.s32 25, %s218
        %p220 = scmp.lt.s32.totalorder %s219, 13
        %s221 = scalar_select %p220, %s219, 13
        %s222 = smul.u32 128, %s221
        %v223 = vld [vmem:[%s185] sm:$0xff]
        %v224 = vld [vmem:[%s185 + $0x8] sm:$0xff]
        %v225 = vld [vmem:[%s185 + $0x10] sm:$0xff]
        %v226 = vld [vmem:[%s185 + $0x18] sm:$0xff]
        %v227 = vld [vmem:[%s185 + $0x20] sm:$0xff]
        %v228 = vld [vmem:[%s185 + $0x28] sm:$0xff]
        %v229 = vld [vmem:[%s185 + $0x30] sm:$0xff]
        %v230 = vld [vmem:[%s185 + $0x38] sm:$0xff]
        %v231 = vld [vmem:[%s185 + $0x40] sm:$0xff]
        %v232 = vld [vmem:[%s185 + $0x48] sm:$0xff]
        %v233 = vld [vmem:[%s185 + $0x50] sm:$0xff]
        %v234 = vld [vmem:[%s185 + $0x58] sm:$0xff]
        %v235 = vld [vmem:[%s185 + $0x60] sm:$0xff]
        %v236 = vld [vmem:[%s185 + $0x68] sm:$0xff]
        %v237 = vld [vmem:[%s185 + $0x70] sm:$0xff]
        %v238 = vld [vmem:[%s185 + $0x78] sm:$0xff]
        %v239 = vld [vmem:[%s185 + $0x80] sm:$0xff]
        %v240 = vld [vmem:[%s185 + $0x88] sm:$0xff]
        %v241 = vld [vmem:[%s185 + $0x90] sm:$0xff]
        %v242 = vld [vmem:[%s185 + $0x98] sm:$0xff]
        %v243 = vld [vmem:[%s185 + $0xa0] sm:$0xff]
        %v244 = vld [vmem:[%s185 + $0xa8] sm:$0xff]
        %v245 = vld [vmem:[%s185 + $0xb0] sm:$0xff]
        %v246 = vld [vmem:[%s185 + $0xb8] sm:$0xff]
        %v247 = vld [vmem:[%s185 + $0xc0] sm:$0xff]
        %v248 = vld [vmem:[%s185 + $0xc8] sm:$0xff]
        %v249 = vld [vmem:[#allocation5] sm:$0xff]
        %v250 = vld [vmem:[#allocation5 + $0x8] sm:$0xff]
        %v251 = vld [vmem:[#allocation5 + $0x10] sm:$0xff]
        %v252 = vld [vmem:[#allocation5 + $0x18] sm:$0xff]
        %v253 = vld [vmem:[#allocation5 + $0x20] sm:$0xff]
        %v254 = vld [vmem:[#allocation5 + $0x28] sm:$0xff]
        %v255 = vld [vmem:[#allocation5 + $0x30] sm:$0xff]
        %v256 = vld [vmem:[#allocation5 + $0x38] sm:$0xff]
        %v257 = vld [vmem:[#allocation5 + $0x40] sm:$0xff]
        %v258 = vld [vmem:[#allocation5 + $0x48] sm:$0xff]
        %v259 = vld [vmem:[#allocation5 + $0x50] sm:$0xff]
        %v260 = vld [vmem:[#allocation5 + $0x58] sm:$0xff]
        %v261 = vld [vmem:[#allocation5 + $0x60] sm:$0xff]
        %v262 = vld [vmem:[#allocation5 + $0x68] sm:$0xff]
        %v263 = vld [vmem:[#allocation5 + $0x70] sm:$0xff]
        %v264 = vld [vmem:[#allocation5 + $0x78] sm:$0xff]
        %v265 = vld [vmem:[#allocation5 + $0x80] sm:$0xff]
        %v266 = vld [vmem:[#allocation5 + $0x88] sm:$0xff]
        %v267 = vld [vmem:[#allocation5 + $0x90] sm:$0xff]
        %v268 = vld [vmem:[#allocation5 + $0x98] sm:$0xff]
        %v269 = vld [vmem:[#allocation5 + $0xa0] sm:$0xff]
        %v270 = vld [vmem:[#allocation5 + $0xa8] sm:$0xff]
        %v271 = vld [vmem:[#allocation5 + $0xb0] sm:$0xff]
        %v272 = vld [vmem:[#allocation5 + $0xb8] sm:$0xff]
        %v273 = vld [vmem:[#allocation5 + $0xc0] sm:$0xff]
        %v274 = vld [vmem:[#allocation5 + $0xc8] sm:$0xff]
        %v275 = vld [vmem:[#allocation5 + $0xd0] sm:$0xff]
        %v276 = vld [vmem:[#allocation5 + $0xd8] sm:$0xff]
        %v277 = vld [vmem:[#allocation5 + $0xe0] sm:$0xff]
        %v278 = vld [vmem:[#allocation5 + $0xe8] sm:$0xff]
        %v279 = vld [vmem:[#allocation5 + $0xf0] sm:$0xff]
        %v280 = vld [vmem:[#allocation5 + $0xf8] sm:$0xff]
        %v281 = vld [vmem:[%s2] sm:$0x1]
        %v283 = vlaneseq
        %v284 = vshrl.u32 %v283, 7
        %v285 = vsub.s32 0, %v284
        %v286 = vrot.slane %v281, %v285
        %288 = vmatprep.subr.mxu0 0.0
        %289 = vmatpush1.msra.mxu0 %v264
        %290 = vmatprep.subr.mxu0 0.0
        %291 = vmatpush1.msra.mxu0 %v263
        %292 = vmatprep.subr.mxu0 0.0
        %293 = vmatpush1.msra.mxu0 %v262
        %294 = vmatprep.subr.mxu0 0.0
        %295 = vmatpush1.msra.mxu0 %v261
        %296 = vmatprep.subr.mxu0 0.0
        %297 = vmatpush1.msra.mxu0 %v260
        %298 = vmatprep.subr.mxu0 0.0
        %299 = vmatpush1.msra.mxu0 %v259
        %300 = vmatprep.subr.mxu0 0.0
        %301 = vmatpush1.msra.mxu0 %v258
        %302 = vmatprep.subr.mxu0 0.0
        %303 = vmatpush1.msra.mxu0 %v257
        %304 = vmatprep.subr.mxu0 0.0
        %305 = vmatpush1.msra.mxu0 %v256
        %306 = vmatprep.subr.mxu0 0.0
        %307 = vmatpush1.msra.mxu0 %v255
        %308 = vmatprep.subr.mxu0 0.0
        %309 = vmatpush1.msra.mxu0 %v254
        %310 = vmatprep.subr.mxu0 0.0
        %311 = vmatpush1.msra.mxu0 %v253
        %312 = vmatprep.subr.mxu0 0.0
        %313 = vmatpush1.msra.mxu0 %v252
        %314 = vmatprep.subr.mxu0 0.0
        %315 = vmatpush1.msra.mxu0 %v251
        %316 = vmatprep.subr.mxu0 0.0
        %317 = vmatpush1.msra.mxu0 %v250
        %318 = vmatprep.subr.mxu0 0.0
        %319 = vmatpush1.msra.mxu0 %v249
        %320 = vmatprep.subr.mxu0 0.0
        %321 = vmatpush2.msra.mxu0 %v280
        %322 = vmatprep.subr.mxu0 0.0
        %323 = vmatpush2.msra.mxu0 %v279
        %324 = vmatprep.subr.mxu0 0.0
        %325 = vmatpush2.msra.mxu0 %v278
        %326 = vmatprep.subr.mxu0 0.0
        %327 = vmatpush2.msra.mxu0 %v277
        %328 = vmatprep.subr.mxu0 0.0
        %329 = vmatpush2.msra.mxu0 %v276
        %330 = vmatprep.subr.mxu0 0.0
        %331 = vmatpush2.msra.mxu0 %v275
        %332 = vmatprep.subr.mxu0 0.0
        %333 = vmatpush2.msra.mxu0 %v274
        %334 = vmatprep.subr.mxu0 0.0
        %335 = vmatpush2.msra.mxu0 %v273
        %336 = vmatprep.subr.mxu0 0.0
        %337 = vmatpush2.msra.mxu0 %v272
        %338 = vmatprep.subr.mxu0 0.0
        %339 = vmatpush2.msra.mxu0 %v271
        %340 = vmatprep.subr.mxu0 0.0
        %341 = vmatpush2.msra.mxu0 %v270
        %342 = vmatprep.subr.mxu0 0.0
        %343 = vmatpush2.msra.mxu0 %v269
        %344 = vmatprep.subr.mxu0 0.0
        %345 = vmatpush2.msra.mxu0 %v268
        %346 = vmatprep.subr.mxu0 0.0
        %347 = vmatpush2.msra.mxu0 %v267
        %348 = vmatprep.subr.mxu0 0.0
        %349 = vmatpush2.msra.mxu0 %v266
        %350 = vmatprep.subr.mxu0 0.0
        %351 = vmatpush2.msra.mxu0 %v265
        %352 = vmatprep.mubr.f32.mxu0 %v224
        %353 = vmatmul.mubr.f32.gmra.mxu0 %v223
        %v354 = vpop.f32.mrf.mxu0
        %v355 = vadd.f32 %v286, %v354
        %v356 = vpop.f32.mrf.mxu0
        %357 = vmatprep.mubr.f32.mxu0 %v226
        %358 = vmatmul.mubr.f32.gmra.mxu0 %v225
        %v359 = vpop.f32.mrf.mxu0
        %v360 = vadd.f32 %v286, %v359
        %v361 = vpop.f32.mrf.mxu0
        %362 = vmatprep.mubr.f32.mxu0 %v228
        %363 = vmatmul.mubr.f32.gmra.mxu0 %v227
        %v364 = vpop.f32.mrf.mxu0
        %v365 = vadd.f32 %v286, %v364
        %v366 = vpop.f32.mrf.mxu0
        %367 = vmatprep.mubr.f32.mxu0 %v230
        %368 = vmatmul.mubr.f32.gmra.mxu0 %v229
        %v369 = vpop.f32.mrf.mxu0
        %v370 = vadd.f32 %v286, %v369
        %v371 = vpop.f32.mrf.mxu0
        %372 = vmatprep.mubr.f32.mxu0 %v232
        %373 = vmatmul.mubr.f32.gmra.mxu0 %v231
        %v374 = vpop.f32.mrf.mxu0
        %v375 = vadd.f32 %v286, %v374
        %v376 = vpop.f32.mrf.mxu0
        %377 = vmatprep.mubr.f32.mxu0 %v234
        %378 = vmatmul.mubr.f32.gmra.mxu0 %v233
        %v379 = vpop.f32.mrf.mxu0
        %v380 = vadd.f32 %v286, %v379
        %v381 = vpop.f32.mrf.mxu0
        %382 = vmatprep.mubr.f32.mxu0 %v236
        %383 = vmatmul.mubr.f32.gmra.mxu0 %v235
        %v384 = vpop.f32.mrf.mxu0
        %v385 = vadd.f32 %v286, %v384
        %v386 = vpop.f32.mrf.mxu0
        %387 = vmatprep.mubr.f32.mxu0 %v238
        %388 = vmatmul.mubr.f32.gmra.mxu0 %v237
        %v389 = vpop.f32.mrf.mxu0
        %v390 = vadd.f32 %v286, %v389
        %v391 = vpop.f32.mrf.mxu0
        %392 = vmatprep.mubr.f32.mxu0 %v240
        %393 = vmatmul.mubr.f32.gmra.mxu0 %v239
        %v394 = vpop.f32.mrf.mxu0
        %v395 = vadd.f32 %v286, %v394
        %v396 = vpop.f32.mrf.mxu0
        %397 = vmatprep.mubr.f32.mxu0 %v242
        %398 = vmatmul.mubr.f32.gmra.mxu0 %v241
        %v399 = vpop.f32.mrf.mxu0
        %v400 = vadd.f32 %v286, %v399
        %v401 = vpop.f32.mrf.mxu0
        %402 = vmatprep.mubr.f32.mxu0 %v244
        %403 = vmatmul.mubr.f32.gmra.mxu0 %v243
        %v404 = vpop.f32.mrf.mxu0
        %v405 = vadd.f32 %v286, %v404
        %v406 = vpop.f32.mrf.mxu0
        %407 = vmatprep.mubr.f32.mxu0 %v246
        %408 = vmatmul.mubr.f32.gmra.mxu0 %v245
        %v409 = vpop.f32.mrf.mxu0
        %v410 = vadd.f32 %v286, %v409
        %v411 = vpop.f32.mrf.mxu0
        %412 = vmatprep.mubr.f32.mxu0 %v248
        %413 = vmatmul.mubr.f32.gmra.mxu0 %v247
        %v414 = vpop.f32.mrf.mxu0
        %v415 = vadd.f32 %v286, %v414
        %v416 = vpop.f32.mrf.mxu0
        %417 = vdwg.mxu0
        %418 = vst [vmem:[%s211] sm:$0xff] %v355
        %419 = vst [vmem:[%s211 + $0x8] sm:$0xff] %v360
        %420 = vst [vmem:[%s211 + $0x10] sm:$0xff] %v365
        %421 = vst [vmem:[%s211 + $0x18] sm:$0xff] %v370
        %422 = vst [vmem:[%s211 + $0x20] sm:$0xff] %v375
        %423 = vst [vmem:[%s211 + $0x28] sm:$0xff] %v380
        %424 = vst [vmem:[%s211 + $0x30] sm:$0xff] %v385
        %425 = vst [vmem:[%s211 + $0x38] sm:$0xff] %v390
        %426 = vst [vmem:[%s211 + $0x40] sm:$0xff] %v395
        %427 = vst [vmem:[%s211 + $0x48] sm:$0xff] %v400
        %428 = vst [vmem:[%s211 + $0x50] sm:$0xff] %v405
        %429 = vst [vmem:[%s211 + $0x58] sm:$0xff] %v410
        %430 = vst [vmem:[%s211 + $0x60] sm:$0xff] %v415
        %s431 = sand.u32 %s97, 1
        %s432 = scalar_lea.sflag [#allocation4], %s431
        %s433 = sand.u32 %s97, 1
        %s434 = smul.addr %s433, 104
        %s435 = scalar_lea.vmem [#allocation7], %s434
        // Predicated region
        $region41: #{tpu_custom_call.1} parent=31 // pred_check
          %p436 = pneg %p107
        $region42: #{tpu_custom_call.1} parent=31 // pred_check_branch
          %438 = sbr.rel (%p436) target = $region44
        $region43: #{tpu_custom_call.1} parent=31 // pred_region
          %s439 = smul.u32 13, %s21
          %s440 = ssub.s32 25, %s439
          %p441 = scmp.lt.s32.totalorder %s440, 13
          %s442 = scalar_select %p441, %s440, 13
          %s443 = smul.u32 128, %s442
          %s445 = ssub.s32 1664, %s443
          %446 = vsyncadd %s432, %s445
          %p447 = scmp.ne.s32.totalorder 0, %s443
          %s448 = smul.addr %s439, 128
          %s449 = scalar_lea.hbm %s3, %s448
          %s450 = smul.u32 8, %s442
          %s451 = sshll.u32 %s435, 4
          %s452 = int_to_ptr.vmem [resolvable:$true] %s451
          %s453 = sshll.u32 %s450, 4
          %457 = dma.vmem_to_hbm [thread:$0]  (%p447), %s452, %s453, %s449, %s432, 128, 128, 8
        $region44: #{tpu_custom_call.1} parent=31 // pred_fallthru
          _
      $region32: #{tpu_custom_call.1} parent=5 // pred_fallthru
        _
      %p458 = scmp.le.s32.totalorder 2, %s16
      // Predicated region
      $region45: #{tpu_custom_call.1} parent=5 // pred_check
        %p459 = pneg %p458
      $region46: #{tpu_custom_call.1} parent=5 // pred_check_branch
        %461 = sbr.rel (%p459) target = $region48
      $region47: #{tpu_custom_call.1} parent=5 // pred_region
        %s462 = ssub.s32 %s16, 2
        // Predicated region
        $region49: #{tpu_custom_call.1} parent=47 // pred_check
          %p463 = pneg %p113
        $region50: #{tpu_custom_call.1} parent=47 // pred_check_branch
          %465 = sbr.rel (%p463) target = $region52
        $region51: #{tpu_custom_call.1} parent=47 // pred_region
          %s466 = sand.u32 %s98, 1
          %s467 = scalar_lea.sflag [#allocation4], %s466
          %s468 = sand.u32 %s98, 1
          %s469 = smul.addr %s468, 104
          %s470 = scalar_lea.vmem [#allocation7], %s469
          %471 = dma.done %s467, 1664
        $region52: #{tpu_custom_call.1} parent=47 // pred_fallthru
          _
      $region48: #{tpu_custom_call.1} parent=5 // pred_fallthru
        _
    $region6: #{tpu_custom_call.1} parent=1 // loop_footer
      %s20 = sadd.s32 1, %s16
    $region7: #{tpu_custom_call.1} parent=1 // loop_footer_branch
      %15 = sbr.rel target = $region3
    $region8: #{tpu_custom_call.1} parent=1 // loop_exit
      _
    %472 = vsyncpa [#allocation3], 1
    %s473 = scalar_lea.sflag [#allocation3], 1
    %474 = vsyncpa %s473, 1
    %475 = vsyncpa [#allocation6], 1
    %476 = vsyncpa [#allocation4], 1
    %s477 = scalar_lea.sflag [#allocation4], 1
    %478 = vsyncpa %s477, 1

</llo_original>
